<compile_context>
chip_gen: v5e
topology: v5e:2x2
jax: 0.10.0
libtpu: 0.0.40
codegen_flags: <defaults>
</compile_context>

<pallas_src>
import functools

import jax
import jax.numpy as jnp
from jax.experimental import pallas as pl
from jax.experimental.pallas import tpu as pltpu


# ----------------------------- Pallas kernel ------------------------------- #

def _fused_conv3x3_bn_kernel(x_ref, w_ref, g_ref, b_ref, o_ref, col_ref,
                             *, N, H, W, Cin, Cout, cpad, pad, eps):
    """Fused 3x3 'same' conv (bias dropped) + training-mode BatchNorm2d.

    x_ref  : (N, Cin, H*W)             input, flattened spatial on lanes
    w_ref  : (Cout, 9*cpad)            weights, rows ordered (tap, channel-padded)
    g_ref  : (Cout, 1)                 BN gamma
    b_ref  : (Cout, 1)                 BN beta
    o_ref  : (N, Cout, H*W)            output, lane-dense (H*W on lanes)
    col_ref: (9*cpad, 2*pad + N*H*W)   VMEM scratch holding the im2col operand
    """
    HW = H * W
    L = N * HW

    # Row / column index of every source pixel along the flattened spatial axis.
    m = jax.lax.broadcasted_iota(jnp.int32, (1, HW), 1)
    if W & (W - 1) == 0:   # power-of-two spatial width: use shifts, not vector int div
        mi = jnp.right_shift(m, W.bit_length() - 1)
        mj = jnp.bitwise_and(m, W - 1)
    else:
        mi = m // W
        mj = m % W

    # ---- 1) stage the im2col operand once into VMEM ------------------------
    # Tap t=(dh,dw) needs x shifted by off=(dh-1)*W+(dw-1) along the flattened
    # spatial axis.  The shift is folded into the *write* lane offset so a single
    # read col_ref[:, pad:pad+L] is the whole im2col matrix, and the conv zero
    # padding is folded into a source-side mask: a source pixel is kept iff the
    # output position it feeds for this tap lies inside the image.
    col_ref[...] = jnp.zeros_like(col_ref)
    for n in range(N):
        xn = x_ref[n]                                        # (Cin, HW)
        for dh in range(3):
            for dw in range(3):
                t = dh * 3 + dw
                off = (dh - 1) * W + (dw - 1)
                conds = []
                if dh == 0:
                    conds.append(mi <= H - 2)    # last source row feeds no output
                if dh == 2:
                    conds.append(mi >= 1)        # first source row feeds no output
                if dw == 0:
                    conds.append(mj <= W - 2)
                if dw == 2:
                    conds.append(mj >= 1)
                if conds:
                    cond = conds[0]
                    for c in conds[1:]:
                        cond = cond & c
                    xm = jnp.where(cond, xn, jnp.zeros((), xn.dtype))
                else:
                    xm = xn                                   # center tap: no mask
                start = pad - off + n * HW
                col_ref[t * cpad:t * cpad + Cin, start:start + HW] = xm

    # ---- 2) one MXU matmul: spatial (N*H*W) sits on the output lane dim ----
    col = col_ref[:, pad:pad + L]                             # (9*cpad, L)
    y = jnp.dot(w_ref[...], col,
                preferred_element_type=jnp.float32)           # (Cout, L) f32

    # ---- 3) fused BatchNorm, training-mode batch stats (one-pass sum/sumsq) -
    s1 = jnp.sum(y, axis=1, keepdims=True)                    # (Cout, 1)
    s2 = jnp.sum(y * y, axis=1, keepdims=True)                # (Cout, 1)
    mean = s1 * (1.0 / L)
    var = s2 * (1.0 / L) - mean * mean                        # biased var, like PyTorch
    scale = jax.lax.rsqrt(var + eps) * g_ref[...]
    shift = b_ref[...] - mean * scale
    yn = y * scale + shift                                    # (Cout, L)

    # ---- 4) lane-dense stores: one (Cout, H*W) slab per batch element ------
    for n in range(N):
        o_ref[n] = yn[:, n * HW:(n + 1) * HW].astype(o_ref.dtype)


# ------------------------------ JAX wrapper -------------------------------- #

@functools.partial(jax.jit, static_argnames=("eps", "compute_dtype"))
def conv_block_forward(x_nchw, w_oihw, conv_bias, gamma, beta,
                       eps=1e-5, compute_dtype=jnp.float32):
    """PyTorch ConvBlock forward (NCHW in / NCHW out).

    `conv_bias` is accepted for API parity but unused: a per-channel constant
    added before training-mode BatchNorm is cancelled exactly by the mean
    subtraction, so dropping it leaves the output unchanged.
    """
    del conv_bias
    N, Cin, H, W = x_nchw.shape
    Cout = w_oihw.shape[0]
    HW = H * W
    L = N * HW
    cpad = -(-Cin // 8) * 8          # channels padded to the f32 sublane tile
    pad = W + 1                      # bound on |tap shift| along flattened spatial

    # Free reshape (no transpose, no spatial pad): NCHW -> (N, Cin, H*W).
    x2 = x_nchw.reshape(N, Cin, HW).astype(compute_dtype)
    # Weights OIHW -> (Cout, 9*cpad), rows ordered (tap, channel); tiny tensor.
    wt = jnp.transpose(w_oihw.astype(compute_dtype), (0, 2, 3, 1))   # (Cout,3,3,Cin)
    wt = jnp.pad(wt, ((0, 0), (0, 0), (0, 0), (0, cpad - Cin)))
    w_mat = wt.reshape(Cout, 9 * cpad)
    g2 = gamma.reshape(Cout, 1).astype(jnp.float32)
    b2 = beta.reshape(Cout, 1).astype(jnp.float32)

    kernel = functools.partial(
        _fused_conv3x3_bn_kernel,
        N=N, H=H, W=W, Cin=Cin, Cout=Cout, cpad=cpad, pad=pad, eps=eps)

    out = pl.pallas_call(
        kernel,
        out_shape=jax.ShapeDtypeStruct((N, Cout, HW), jnp.float32),
        # Whole problem is a single block (a few hundred KiB << VMEM): no grid,
        # one invocation, conv+BN fully fused, no per-step pipeline overhead.
        # TODO(synk): for production-sized activations, grid over (N, H-row blocks)
        # with cross-step sum/sum-sq accumulators (pl.when init/finalize) so blocks
        # fit v7x's 64 MiB VMEM, and mark the batch axis parallel for its 2 TCs.
        scratch_shapes=[pltpu.VMEM((9 * cpad, 2 * pad + L), compute_dtype)],
    )(x2, w_mat, g2, b2)

    return out.reshape(N, Cout, H, W)     # free reshape back to NCHW


# ------------------------------ reference ---------------------------------- #

def conv_block_reference(x_nchw, w_oihw, conv_bias, gamma, beta, eps=1e-5):
    y = jax.lax.conv_general_dilated(
        x_nchw.astype(jnp.float32), w_oihw.astype(jnp.float32),
        window_strides=(1, 1), padding=((1, 1), (1, 1)),
        dimension_numbers=("NCHW", "OIHW", "NCHW"),
        precision=jax.lax.Precision.HIGHEST)
    y = y + conv_bias.reshape(1, -1, 1, 1)
    mean = jnp.mean(y, axis=(0, 2, 3), keepdims=True)
    var = jnp.mean((y - mean) ** 2, axis=(0, 2, 3), keepdims=True)
    return (y - mean) * jax.lax.rsqrt(var + eps) * gamma.reshape(1, -1, 1, 1) \
        + beta.reshape(1, -1, 1, 1)


# --------------------------------- main ------------------------------------ #

if __name__ == "__main__":
    key = jax.random.PRNGKey(0)
    k_x, k_w, k_b, k_g, k_bt = jax.random.split(key, 5)

    N, Cin, H, W = 2, 4, 16, 16
    Cout = 8

    x = jax.random.normal(k_x, (N, Cin, H, W), dtype=jnp.float32)
    w = jax.random.normal(k_w, (Cout, Cin, 3, 3), dtype=jnp.float32) * 0.1
    conv_bias = jax.random.normal(k_b, (Cout,), dtype=jnp.float32) * 0.05
    gamma = 1.0 + 0.1 * jax.random.normal(k_g, (Cout,), dtype=jnp.float32)
    beta = 0.1 * jax.random.normal(k_bt, (Cout,), dtype=jnp.float32)

    out = conv_block_forward(x, w, conv_bias, gamma, beta)
    out = jax.block_until_ready(out)

    ref = conv_block_reference(x, w, conv_bias, gamma, beta)
    assert out.shape == (N, Cout, H, W)
    assert jnp.allclose(out, ref, rtol=1e-4, atol=1e-4), \
        float(jnp.max(jnp.abs(out - ref)))

    print("KERNEL_OK")
</pallas_src>

<mosaic_0001>
module attributes {stable_mosaic.version = 11 : i64} {
  func.func @_fused_conv3x3_bn_kernel(%arg0: memref<2x4x256xf32, #tpu.memory_space<vmem>>, %arg1: memref<8x72xf32, #tpu.memory_space<vmem>>, %arg2: memref<8x1xf32, #tpu.memory_space<vmem>>, %arg3: memref<8x1xf32, #tpu.memory_space<vmem>>, %arg4: memref<2x8x256xf32, #tpu.memory_space<vmem>>, %arg5: memref<72x546xf32, #tpu.memory_space<vmem>>) attributes {dimension_semantics = [], scalar_prefetch = 0 : i64, scratch_operands = 1 : i64, tpu.core_type = #tpu.core_type<tc>} {
    %0 = tpu.iota {dimensions = array<i32: 1>} : vector<1x256xi32>
    %c4_i32 = arith.constant 4 : i32
    %1 = vector.broadcast %c4_i32 : i32 to vector<1x256xi32>
    %2 = arith.shrsi %0, %1 : vector<1x256xi32>
    %c15_i32 = arith.constant 15 : i32
    %3 = vector.broadcast %c15_i32 : i32 to vector<1x256xi32>
    %4 = arith.andi %0, %3 : vector<1x256xi32>
    %cst = arith.constant 0.000000e+00 : f32
    %5 = vector.broadcast %cst : f32 to vector<72x546xf32>
    %c0 = arith.constant 0 : index
    %c0_0 = arith.constant 0 : index
    %6 = vector.load %arg5[%c0, %c0_0] : memref<72x546xf32, #tpu.memory_space<vmem>>, vector<72x546xf32>
    tpu.vector_store %arg5[%c0, %c0_0], %5 {strides = array<i32>} : memref<72x546xf32, #tpu.memory_space<vmem>>, vector<72x546xf32>,
    %c0_1 = arith.constant 0 : index
    %c0_2 = arith.constant 0 : index
    %c0_3 = arith.constant 0 : index
    %7 = vector.load %arg0[%c0_1, %c0_2, %c0_3] : memref<2x4x256xf32, #tpu.memory_space<vmem>>, vector<1x4x256xf32>
    %8 = vector.shape_cast %7 : vector<1x4x256xf32> to vector<4x256xf32>
    %c14_i32 = arith.constant 14 : i32
    %9 = vector.broadcast %c14_i32 : i32 to vector<1x256xi32>
    %10 = arith.cmpi sle, %2, %9 : vector<1x256xi32>
    %c14_i32_4 = arith.constant 14 : i32
    %11 = vector.broadcast %c14_i32_4 : i32 to vector<1x256xi32>
    %12 = arith.cmpi sle, %4, %11 : vector<1x256xi32>
    %13 = arith.andi %10, %12 : vector<1x256xi1>
    %cst_5 = arith.constant 0.000000e+00 : f32
    %14 = vector.shape_cast %13 : vector<1x256xi1> to vector<1x256xi1>
    %15 = vector.broadcast %14 : vector<1x256xi1> to vector<4x256xi1>
    %16 = vector.broadcast %cst_5 : f32 to vector<4x256xf32>
    %17 = arith.select %15, %8, %16 : vector<4x256xi1>, vector<4x256xf32>
    %c0_6 = arith.constant 0 : index
    %c34 = arith.constant 34 : index
    %18 = vector.load %arg5[%c0_6, %c34] : memref<72x546xf32, #tpu.memory_space<vmem>>, vector<4x256xf32>
    tpu.vector_store %arg5[%c0_6, %c34], %17 {strides = array<i32>} : memref<72x546xf32, #tpu.memory_space<vmem>>, vector<4x256xf32>,
    %c14_i32_7 = arith.constant 14 : i32
    %19 = vector.broadcast %c14_i32_7 : i32 to vector<1x256xi32>
    %20 = arith.cmpi sle, %2, %19 : vector<1x256xi32>
    %cst_8 = arith.constant 0.000000e+00 : f32
    %21 = vector.shape_cast %20 : vector<1x256xi1> to vector<1x256xi1>
    %22 = vector.broadcast %21 : vector<1x256xi1> to vector<4x256xi1>
    %23 = vector.broadcast %cst_8 : f32 to vector<4x256xf32>
    %24 = arith.select %22, %8, %23 : vector<4x256xi1>, vector<4x256xf32>
    %c8 = arith.constant 8 : index
    %c33 = arith.constant 33 : index
    %25 = vector.load %arg5[%c8, %c33] : memref<72x546xf32, #tpu.memory_space<vmem>>, vector<4x256xf32>
    tpu.vector_store %arg5[%c8, %c33], %24 {strides = array<i32>} : memref<72x546xf32, #tpu.memory_space<vmem>>, vector<4x256xf32>,
    %c14_i32_9 = arith.constant 14 : i32
    %26 = vector.broadcast %c14_i32_9 : i32 to vector<1x256xi32>
    %27 = arith.cmpi sle, %2, %26 : vector<1x256xi32>
    %c1_i32 = arith.constant 1 : i32
    %28 = vector.broadcast %c1_i32 : i32 to vector<1x256xi32>
    %29 = arith.cmpi sge, %4, %28 : vector<1x256xi32>
    %30 = arith.andi %27, %29 : vector<1x256xi1>
    %cst_10 = arith.constant 0.000000e+00 : f32
    %31 = vector.shape_cast %30 : vector<1x256xi1> to vector<1x256xi1>
    %32 = vector.broadcast %31 : vector<1x256xi1> to vector<4x256xi1>
    %33 = vector.broadcast %cst_10 : f32 to vector<4x256xf32>
    %34 = arith.select %32, %8, %33 : vector<4x256xi1>, vector<4x256xf32>
    %c16 = arith.constant 16 : index
    %c32 = arith.constant 32 : index
    %35 = vector.load %arg5[%c16, %c32] : memref<72x546xf32, #tpu.memory_space<vmem>>, vector<4x256xf32>
    tpu.vector_store %arg5[%c16, %c32], %34 {strides = array<i32>} : memref<72x546xf32, #tpu.memory_space<vmem>>, vector<4x256xf32>,
    %c14_i32_11 = arith.constant 14 : i32
    %36 = vector.broadcast %c14_i32_11 : i32 to vector<1x256xi32>
    %37 = arith.cmpi sle, %4, %36 : vector<1x256xi32>
    %cst_12 = arith.constant 0.000000e+00 : f32
    %38 = vector.shape_cast %37 : vector<1x256xi1> to vector<1x256xi1>
    %39 = vector.broadcast %38 : vector<1x256xi1> to vector<4x256xi1>
    %40 = vector.broadcast %cst_12 : f32 to vector<4x256xf32>
    %41 = arith.select %39, %8, %40 : vector<4x256xi1>, vector<4x256xf32>
    %c24 = arith.constant 24 : index
    %c18 = arith.constant 18 : index
    %42 = vector.load %arg5[%c24, %c18] : memref<72x546xf32, #tpu.memory_space<vmem>>, vector<4x256xf32>
    tpu.vector_store %arg5[%c24, %c18], %41 {strides = array<i32>} : memref<72x546xf32, #tpu.memory_space<vmem>>, vector<4x256xf32>,
    %c32_13 = arith.constant 32 : index
    %c17 = arith.constant 17 : index
    %43 = vector.load %arg5[%c32_13, %c17] : memref<72x546xf32, #tpu.memory_space<vmem>>, vector<4x256xf32>
    tpu.vector_store %arg5[%c32_13, %c17], %8 {strides = array<i32>} : memref<72x546xf32, #tpu.memory_space<vmem>>, vector<4x256xf32>,
    %c1_i32_14 = arith.constant 1 : i32
    %44 = vector.broadcast %c1_i32_14 : i32 to vector<1x256xi32>
    %45 = arith.cmpi sge, %4, %44 : vector<1x256xi32>
    %cst_15 = arith.constant 0.000000e+00 : f32
    %46 = vector.shape_cast %45 : vector<1x256xi1> to vector<1x256xi1>
    %47 = vector.broadcast %46 : vector<1x256xi1> to vector<4x256xi1>
    %48 = vector.broadcast %cst_15 : f32 to vector<4x256xf32>
    %49 = arith.select %47, %8, %48 : vector<4x256xi1>, vector<4x256xf32>
    %c40 = arith.constant 40 : index
    %c16_16 = arith.constant 16 : index
    %50 = vector.load %arg5[%c40, %c16_16] : memref<72x546xf32, #tpu.memory_space<vmem>>, vector<4x256xf32>
    tpu.vector_store %arg5[%c40, %c16_16], %49 {strides = array<i32>} : memref<72x546xf32, #tpu.memory_space<vmem>>, vector<4x256xf32>,
    %c1_i32_17 = arith.constant 1 : i32
    %51 = vector.broadcast %c1_i32_17 : i32 to vector<1x256xi32>
    %52 = arith.cmpi sge, %2, %51 : vector<1x256xi32>
    %c14_i32_18 = arith.constant 14 : i32
    %53 = vector.broadcast %c14_i32_18 : i32 to vector<1x256xi32>
    %54 = arith.cmpi sle, %4, %53 : vector<1x256xi32>
    %55 = arith.andi %52, %54 : vector<1x256xi1>
    %cst_19 = arith.constant 0.000000e+00 : f32
    %56 = vector.shape_cast %55 : vector<1x256xi1> to vector<1x256xi1>
    %57 = vector.broadcast %56 : vector<1x256xi1> to vector<4x256xi1>
    %58 = vector.broadcast %cst_19 : f32 to vector<4x256xf32>
    %59 = arith.select %57, %8, %58 : vector<4x256xi1>, vector<4x256xf32>
    %c48 = arith.constant 48 : index
    %c2 = arith.constant 2 : index
    %60 = vector.load %arg5[%c48, %c2] : memref<72x546xf32, #tpu.memory_space<vmem>>, vector<4x256xf32>
    tpu.vector_store %arg5[%c48, %c2], %59 {strides = array<i32>} : memref<72x546xf32, #tpu.memory_space<vmem>>, vector<4x256xf32>,
    %c1_i32_20 = arith.constant 1 : i32
    %61 = vector.broadcast %c1_i32_20 : i32 to vector<1x256xi32>
    %62 = arith.cmpi sge, %2, %61 : vector<1x256xi32>
    %cst_21 = arith.constant 0.000000e+00 : f32
    %63 = vector.shape_cast %62 : vector<1x256xi1> to vector<1x256xi1>
    %64 = vector.broadcast %63 : vector<1x256xi1> to vector<4x256xi1>
    %65 = vector.broadcast %cst_21 : f32 to vector<4x256xf32>
    %66 = arith.select %64, %8, %65 : vector<4x256xi1>, vector<4x256xf32>
    %c56 = arith.constant 56 : index
    %c1 = arith.constant 1 : index
    %67 = vector.load %arg5[%c56, %c1] : memref<72x546xf32, #tpu.memory_space<vmem>>, vector<4x256xf32>
    tpu.vector_store %arg5[%c56, %c1], %66 {strides = array<i32>} : memref<72x546xf32, #tpu.memory_space<vmem>>, vector<4x256xf32>,
    %c1_i32_22 = arith.constant 1 : i32
    %68 = vector.broadcast %c1_i32_22 : i32 to vector<1x256xi32>
    %69 = arith.cmpi sge, %2, %68 : vector<1x256xi32>
    %c1_i32_23 = arith.constant 1 : i32
    %70 = vector.broadcast %c1_i32_23 : i32 to vector<1x256xi32>
    %71 = arith.cmpi sge, %4, %70 : vector<1x256xi32>
    %72 = arith.andi %69, %71 : vector<1x256xi1>
    %cst_24 = arith.constant 0.000000e+00 : f32
    %73 = vector.shape_cast %72 : vector<1x256xi1> to vector<1x256xi1>
    %74 = vector.broadcast %73 : vector<1x256xi1> to vector<4x256xi1>
    %75 = vector.broadcast %cst_24 : f32 to vector<4x256xf32>
    %76 = arith.select %74, %8, %75 : vector<4x256xi1>, vector<4x256xf32>
    %c64 = arith.constant 64 : index
    %c0_25 = arith.constant 0 : index
    %77 = vector.load %arg5[%c64, %c0_25] : memref<72x546xf32, #tpu.memory_space<vmem>>, vector<4x256xf32>
    tpu.vector_store %arg5[%c64, %c0_25], %76 {strides = array<i32>} : memref<72x546xf32, #tpu.memory_space<vmem>>, vector<4x256xf32>,
    %c1_26 = arith.constant 1 : index
    %c0_27 = arith.constant 0 : index
    %c0_28 = arith.constant 0 : index
    %78 = vector.load %arg0[%c1_26, %c0_27, %c0_28] : memref<2x4x256xf32, #tpu.memory_space<vmem>>, vector<1x4x256xf32>
    %79 = vector.shape_cast %78 : vector<1x4x256xf32> to vector<4x256xf32>
    %c14_i32_29 = arith.constant 14 : i32
    %80 = vector.broadcast %c14_i32_29 : i32 to vector<1x256xi32>
    %81 = arith.cmpi sle, %2, %80 : vector<1x256xi32>
    %c14_i32_30 = arith.constant 14 : i32
    %82 = vector.broadcast %c14_i32_30 : i32 to vector<1x256xi32>
    %83 = arith.cmpi sle, %4, %82 : vector<1x256xi32>
    %84 = arith.andi %81, %83 : vector<1x256xi1>
    %cst_31 = arith.constant 0.000000e+00 : f32
    %85 = vector.shape_cast %84 : vector<1x256xi1> to vector<1x256xi1>
    %86 = vector.broadcast %85 : vector<1x256xi1> to vector<4x256xi1>
    %87 = vector.broadcast %cst_31 : f32 to vector<4x256xf32>
    %88 = arith.select %86, %79, %87 : vector<4x256xi1>, vector<4x256xf32>
    %c0_32 = arith.constant 0 : index
    %c290 = arith.constant 290 : index
    %89 = vector.load %arg5[%c0_32, %c290] : memref<72x546xf32, #tpu.memory_space<vmem>>, vector<4x256xf32>
    tpu.vector_store %arg5[%c0_32, %c290], %88 {strides = array<i32>} : memref<72x546xf32, #tpu.memory_space<vmem>>, vector<4x256xf32>,
    %c14_i32_33 = arith.constant 14 : i32
    %90 = vector.broadcast %c14_i32_33 : i32 to vector<1x256xi32>
    %91 = arith.cmpi sle, %2, %90 : vector<1x256xi32>
    %cst_34 = arith.constant 0.000000e+00 : f32
    %92 = vector.shape_cast %91 : vector<1x256xi1> to vector<1x256xi1>
    %93 = vector.broadcast %92 : vector<1x256xi1> to vector<4x256xi1>
    %94 = vector.broadcast %cst_34 : f32 to vector<4x256xf32>
    %95 = arith.select %93, %79, %94 : vector<4x256xi1>, vector<4x256xf32>
    %c8_35 = arith.constant 8 : index
    %c289 = arith.constant 289 : index
    %96 = vector.load %arg5[%c8_35, %c289] : memref<72x546xf32, #tpu.memory_space<vmem>>, vector<4x256xf32>
    tpu.vector_store %arg5[%c8_35, %c289], %95 {strides = array<i32>} : memref<72x546xf32, #tpu.memory_space<vmem>>, vector<4x256xf32>,
    %c14_i32_36 = arith.constant 14 : i32
    %97 = vector.broadcast %c14_i32_36 : i32 to vector<1x256xi32>
    %98 = arith.cmpi sle, %2, %97 : vector<1x256xi32>
    %c1_i32_37 = arith.constant 1 : i32
    %99 = vector.broadcast %c1_i32_37 : i32 to vector<1x256xi32>
    %100 = arith.cmpi sge, %4, %99 : vector<1x256xi32>
    %101 = arith.andi %98, %100 : vector<1x256xi1>
    %cst_38 = arith.constant 0.000000e+00 : f32
    %102 = vector.shape_cast %101 : vector<1x256xi1> to vector<1x256xi1>
    %103 = vector.broadcast %102 : vector<1x256xi1> to vector<4x256xi1>
    %104 = vector.broadcast %cst_38 : f32 to vector<4x256xf32>
    %105 = arith.select %103, %79, %104 : vector<4x256xi1>, vector<4x256xf32>
    %c16_39 = arith.constant 16 : index
    %c288 = arith.constant 288 : index
    %106 = vector.load %arg5[%c16_39, %c288] : memref<72x546xf32, #tpu.memory_space<vmem>>, vector<4x256xf32>
    tpu.vector_store %arg5[%c16_39, %c288], %105 {strides = array<i32>} : memref<72x546xf32, #tpu.memory_space<vmem>>, vector<4x256xf32>,
    %c14_i32_40 = arith.constant 14 : i32
    %107 = vector.broadcast %c14_i32_40 : i32 to vector<1x256xi32>
    %108 = arith.cmpi sle, %4, %107 : vector<1x256xi32>
    %cst_41 = arith.constant 0.000000e+00 : f32
    %109 = vector.shape_cast %108 : vector<1x256xi1> to vector<1x256xi1>
    %110 = vector.broadcast %109 : vector<1x256xi1> to vector<4x256xi1>
    %111 = vector.broadcast %cst_41 : f32 to vector<4x256xf32>
    %112 = arith.select %110, %79, %111 : vector<4x256xi1>, vector<4x256xf32>
    %c24_42 = arith.constant 24 : index
    %c274 = arith.constant 274 : index
    %113 = vector.load %arg5[%c24_42, %c274] : memref<72x546xf32, #tpu.memory_space<vmem>>, vector<4x256xf32>
    tpu.vector_store %arg5[%c24_42, %c274], %112 {strides = array<i32>} : memref<72x546xf32, #tpu.memory_space<vmem>>, vector<4x256xf32>,
    %c32_43 = arith.constant 32 : index
    %c273 = arith.constant 273 : index
    %114 = vector.load %arg5[%c32_43, %c273] : memref<72x546xf32, #tpu.memory_space<vmem>>, vector<4x256xf32>
    tpu.vector_store %arg5[%c32_43, %c273], %79 {strides = array<i32>} : memref<72x546xf32, #tpu.memory_space<vmem>>, vector<4x256xf32>,
    %c1_i32_44 = arith.constant 1 : i32
    %115 = vector.broadcast %c1_i32_44 : i32 to vector<1x256xi32>
    %116 = arith.cmpi sge, %4, %115 : vector<1x256xi32>
    %cst_45 = arith.constant 0.000000e+00 : f32
    %117 = vector.shape_cast %116 : vector<1x256xi1> to vector<1x256xi1>
    %118 = vector.broadcast %117 : vector<1x256xi1> to vector<4x256xi1>
    %119 = vector.broadcast %cst_45 : f32 to vector<4x256xf32>
    %120 = arith.select %118, %79, %119 : vector<4x256xi1>, vector<4x256xf32>
    %c40_46 = arith.constant 40 : index
    %c272 = arith.constant 272 : index
    %121 = vector.load %arg5[%c40_46, %c272] : memref<72x546xf32, #tpu.memory_space<vmem>>, vector<4x256xf32>
    tpu.vector_store %arg5[%c40_46, %c272], %120 {strides = array<i32>} : memref<72x546xf32, #tpu.memory_space<vmem>>, vector<4x256xf32>,
    %c1_i32_47 = arith.constant 1 : i32
    %122 = vector.broadcast %c1_i32_47 : i32 to vector<1x256xi32>
    %123 = arith.cmpi sge, %2, %122 : vector<1x256xi32>
    %c14_i32_48 = arith.constant 14 : i32
    %124 = vector.broadcast %c14_i32_48 : i32 to vector<1x256xi32>
    %125 = arith.cmpi sle, %4, %124 : vector<1x256xi32>
    %126 = arith.andi %123, %125 : vector<1x256xi1>
    %cst_49 = arith.constant 0.000000e+00 : f32
    %127 = vector.shape_cast %126 : vector<1x256xi1> to vector<1x256xi1>
    %128 = vector.broadcast %127 : vector<1x256xi1> to vector<4x256xi1>
    %129 = vector.broadcast %cst_49 : f32 to vector<4x256xf32>
    %130 = arith.select %128, %79, %129 : vector<4x256xi1>, vector<4x256xf32>
    %c48_50 = arith.constant 48 : index
    %c258 = arith.constant 258 : index
    %131 = vector.load %arg5[%c48_50, %c258] : memref<72x546xf32, #tpu.memory_space<vmem>>, vector<4x256xf32>
    tpu.vector_store %arg5[%c48_50, %c258], %130 {strides = array<i32>} : memref<72x546xf32, #tpu.memory_space<vmem>>, vector<4x256xf32>,
    %c1_i32_51 = arith.constant 1 : i32
    %132 = vector.broadcast %c1_i32_51 : i32 to vector<1x256xi32>
    %133 = arith.cmpi sge, %2, %132 : vector<1x256xi32>
    %cst_52 = arith.constant 0.000000e+00 : f32
    %134 = vector.shape_cast %133 : vector<1x256xi1> to vector<1x256xi1>
    %135 = vector.broadcast %134 : vector<1x256xi1> to vector<4x256xi1>
    %136 = vector.broadcast %cst_52 : f32 to vector<4x256xf32>
    %137 = arith.select %135, %79, %136 : vector<4x256xi1>, vector<4x256xf32>
    %c56_53 = arith.constant 56 : index
    %c257 = arith.constant 257 : index
    %138 = vector.load %arg5[%c56_53, %c257] : memref<72x546xf32, #tpu.memory_space<vmem>>, vector<4x256xf32>
    tpu.vector_store %arg5[%c56_53, %c257], %137 {strides = array<i32>} : memref<72x546xf32, #tpu.memory_space<vmem>>, vector<4x256xf32>,
    %c1_i32_54 = arith.constant 1 : i32
    %139 = vector.broadcast %c1_i32_54 : i32 to vector<1x256xi32>
    %140 = arith.cmpi sge, %2, %139 : vector<1x256xi32>
    %c1_i32_55 = arith.constant 1 : i32
    %141 = vector.broadcast %c1_i32_55 : i32 to vector<1x256xi32>
    %142 = arith.cmpi sge, %4, %141 : vector<1x256xi32>
    %143 = arith.andi %140, %142 : vector<1x256xi1>
    %cst_56 = arith.constant 0.000000e+00 : f32
    %144 = vector.shape_cast %143 : vector<1x256xi1> to vector<1x256xi1>
    %145 = vector.broadcast %144 : vector<1x256xi1> to vector<4x256xi1>
    %146 = vector.broadcast %cst_56 : f32 to vector<4x256xf32>
    %147 = arith.select %145, %79, %146 : vector<4x256xi1>, vector<4x256xf32>
    %c64_57 = arith.constant 64 : index
    %c256 = arith.constant 256 : index
    %148 = vector.load %arg5[%c64_57, %c256] : memref<72x546xf32, #tpu.memory_space<vmem>>, vector<4x256xf32>
    tpu.vector_store %arg5[%c64_57, %c256], %147 {strides = array<i32>} : memref<72x546xf32, #tpu.memory_space<vmem>>, vector<4x256xf32>,
    %c0_58 = arith.constant 0 : index
    %c17_59 = arith.constant 17 : index
    %149 = vector.load %arg5[%c0_58, %c17_59] : memref<72x546xf32, #tpu.memory_space<vmem>>, vector<72x512xf32>
    %c0_60 = arith.constant 0 : index
    %c0_61 = arith.constant 0 : index
    %150 = vector.load %arg1[%c0_60, %c0_61] : memref<8x72xf32, #tpu.memory_space<vmem>>, vector<8x72xf32>
    %cst_62 = arith.constant dense<0.000000e+00> : vector<8x512xf32>
    %151 = tpu.matmul %150, %149, %cst_62 {dimension_numbers = #tpu.dot_dimension_numbers<[1], [0], [0], [1], [0, 0, 1, 1], [], []>} : vector<8x72xf32>, vector<72x512xf32>, vector<8x512xf32> -> vector<8x512xf32>
    %cst_63 = arith.constant dense<0.000000e+00> : vector<8xf32>
    %152 = vector.multi_reduction <add>, %151, %cst_63 [1] : vector<8x512xf32> to vector<8xf32>
    %153 = vector.shape_cast %152 : vector<8xf32> to vector<8x1xf32>
    %154 = arith.mulf %151, %151 : vector<8x512xf32>
    %cst_64 = arith.constant dense<0.000000e+00> : vector<8xf32>
    %155 = vector.multi_reduction <add>, %154, %cst_64 [1] : vector<8x512xf32> to vector<8xf32>
    %156 = vector.shape_cast %155 : vector<8xf32> to vector<8x1xf32>
    %cst_65 = arith.constant 0.001953125 : f32
    %157 = vector.broadcast %cst_65 : f32 to vector<8x1xf32>
    %158 = arith.mulf %153, %157 : vector<8x1xf32>
    %cst_66 = arith.constant 0.001953125 : f32
    %159 = vector.broadcast %cst_66 : f32 to vector<8x1xf32>
    %160 = arith.mulf %156, %159 : vector<8x1xf32>
    %161 = arith.mulf %158, %158 : vector<8x1xf32>
    %162 = arith.subf %160, %161 : vector<8x1xf32>
    %cst_67 = arith.constant 9.99999974E-6 : f32
    %163 = vector.broadcast %cst_67 : f32 to vector<8x1xf32>
    %164 = arith.addf %162, %163 : vector<8x1xf32>
    %165 = math.rsqrt %164 : vector<8x1xf32>
    %c0_68 = arith.constant 0 : index
    %c0_69 = arith.constant 0 : index
    %166 = vector.load %arg2[%c0_68, %c0_69] : memref<8x1xf32, #tpu.memory_space<vmem>>, vector<8x1xf32>
    %167 = arith.mulf %165, %166 : vector<8x1xf32>
    %c0_70 = arith.constant 0 : index
    %c0_71 = arith.constant 0 : index
    %168 = vector.load %arg3[%c0_70, %c0_71] : memref<8x1xf32, #tpu.memory_space<vmem>>, vector<8x1xf32>
    %169 = arith.mulf %158, %167 : vector<8x1xf32>
    %170 = arith.subf %168, %169 : vector<8x1xf32>
    %171 = vector.broadcast %167 : vector<8x1xf32> to vector<8x512xf32>
    %172 = arith.mulf %151, %171 : vector<8x512xf32>
    %173 = vector.broadcast %170 : vector<8x1xf32> to vector<8x512xf32>
    %174 = arith.addf %172, %173 : vector<8x512xf32>
    %175 = vector.extract_strided_slice %174 {offsets = [0, 0], sizes = [8, 256], strides = [1, 1]} : vector<8x512xf32> to vector<8x256xf32>
    %c0_72 = arith.constant 0 : index
    %c0_73 = arith.constant 0 : index
    %c0_74 = arith.constant 0 : index
    %176 = vector.load %arg4[%c0_72, %c0_73, %c0_74] : memref<2x8x256xf32, #tpu.memory_space<vmem>>, vector<1x8x256xf32>
    %177 = vector.shape_cast %176 : vector<1x8x256xf32> to vector<8x256xf32>
    %178 = vector.shape_cast %175 : vector<8x256xf32> to vector<1x8x256xf32>
    tpu.vector_store %arg4[%c0_72, %c0_73, %c0_74], %178 {strides = array<i32>} : memref<2x8x256xf32, #tpu.memory_space<vmem>>, vector<1x8x256xf32>,
    %179 = vector.extract_strided_slice %174 {offsets = [0, 256], sizes = [8, 256], strides = [1, 1]} : vector<8x512xf32> to vector<8x256xf32>
    %c1_75 = arith.constant 1 : index
    %c0_76 = arith.constant 0 : index
    %c0_77 = arith.constant 0 : index
    %180 = vector.load %arg4[%c1_75, %c0_76, %c0_77] : memref<2x8x256xf32, #tpu.memory_space<vmem>>, vector<1x8x256xf32>
    %181 = vector.shape_cast %180 : vector<1x8x256xf32> to vector<8x256xf32>
    %182 = vector.shape_cast %179 : vector<8x256xf32> to vector<1x8x256xf32>
    tpu.vector_store %arg4[%c1_75, %c0_76, %c0_77], %182 {strides = array<i32>} : memref<2x8x256xf32, #tpu.memory_space<vmem>>, vector<1x8x256xf32>,
    return
  }
}

</mosaic_0001>

<llo_original>
// kernel: conv_block_forward.1
$region0: #{conv_block_forward.1}
  #allocation0 [shape = 'u32[]', space=smem, size = 0x4, offset = 0x4, fixed_abs, tag = 'smem constant byte address 0x4 - core index']
  #allocation1 [shape = 'u32[72,128]{1,0:T(1,128)}', space=vmem, size = 0x9000, scoped, tag = 'internal scratch']
  #allocation2 [shape = 'f32[72,546]{1,0:T(8,128)}', space=vmem, size = 0x2d000, scoped, tag = 'scratch operand']
  %s0 = inlined_call_operand.vmem [shape: f32[2,4,256], index: 0, kind: input, shape index: {}]
  %s1 = inlined_call_operand.vmem [shape: f32[8,72], index: 1, kind: input, shape index: {}]
  %s2 = inlined_call_operand.vmem [shape: f32[8,1], index: 2, kind: input, shape index: {}]
  %s3 = inlined_call_operand.vmem [shape: f32[8,1], index: 3, kind: input, shape index: {}]
  %s4 = inlined_call_operand.vmem [shape: f32[2,8,256], index: 4, kind: output, shape index: {}]
  %s5 = sld [smem:[#allocation0]]
  $region26: #{conv_block_forward.1} parent=0
    _
  %s7 = ssub.s32 1, %s5
  %s8 = scalar_select 0, %s7, %s5
  // Predicated region
  $region2: #{conv_block_forward.1} parent=0 // pred_check
    _
  $region3: #{conv_block_forward.1} parent=0 // pred_check_branch
    %10 = sbr.rel (0) target = $region5
  $region4: #{conv_block_forward.1} parent=0 // pred_region
    _
  $region5: #{conv_block_forward.1} parent=0 // pred_fallthru
    _
  // Predicated region
  $region6: #{conv_block_forward.1} parent=0 // pred_check
    _
  $region7: #{conv_block_forward.1} parent=0 // pred_check_branch
    %12 = sbr.rel (0) target = $region9
  $region8: #{conv_block_forward.1} parent=0 // pred_region
    _
  $region9: #{conv_block_forward.1} parent=0 // pred_fallthru
    _
  // Predicated region
  $region10: #{conv_block_forward.1} parent=0 // pred_check
    _
  $region11: #{conv_block_forward.1} parent=0 // pred_check_branch
    %14 = sbr.rel (0) target = $region13
  $region12: #{conv_block_forward.1} parent=0 // pred_region
    _
  $region13: #{conv_block_forward.1} parent=0 // pred_fallthru
    _
  // Predicated region
  $region14: #{conv_block_forward.1} parent=0 // pred_check
    _
  $region15: #{conv_block_forward.1} parent=0 // pred_check_branch
    %16 = sbr.rel (0) target = $region17
  $region16: #{conv_block_forward.1} parent=0 // pred_region
    _
  $region17: #{conv_block_forward.1} parent=0 // pred_fallthru
    _
  %v17 = vlaneseq
  %v18 = vand.u32 %v17, 127
  %v19 = vadd.s32 %v18, 128
  %v20 = vshra.s32 %v18, 4
  %v21 = vshra.s32 %v19, 4
  %v22 = vand.u32 %v18, 15
  %v23 = vand.u32 %v19, 15
  %24 = vst [vmem:[#allocation2] sm:$0xff] 0.0
  %25 = vst [vmem:[#allocation2 + $0x8] sm:$0xff] 0.0
  %26 = vst [vmem:[#allocation2 + $0x10] sm:$0xff] 0.0
  %27 = vst [vmem:[#allocation2 + $0x18] sm:$0xff] 0.0
  %vm28 = vcmask 277504
  %29 = vst.msk [vmem:[#allocation2 + $0x20] sm:$0xff] %vm28, 0.0
  %30 = vst [vmem:[#allocation2 + $0x28] sm:$0xff] 0.0
  %31 = vst [vmem:[#allocation2 + $0x30] sm:$0xff] 0.0
  %32 = vst [vmem:[#allocation2 + $0x38] sm:$0xff] 0.0
  %33 = vst [vmem:[#allocation2 + $0x40] sm:$0xff] 0.0
  %34 = vst.msk [vmem:[#allocation2 + $0x48] sm:$0xff] %vm28, 0.0
  %35 = vst [vmem:[#allocation2 + $0x50] sm:$0xff] 0.0
  %36 = vst [vmem:[#allocation2 + $0x58] sm:$0xff] 0.0
  %37 = vst [vmem:[#allocation2 + $0x60] sm:$0xff] 0.0
  %38 = vst [vmem:[#allocation2 + $0x68] sm:$0xff] 0.0
  %39 = vst.msk [vmem:[#allocation2 + $0x70] sm:$0xff] %vm28, 0.0
  %40 = vst [vmem:[#allocation2 + $0x78] sm:$0xff] 0.0
  %41 = vst [vmem:[#allocation2 + $0x80] sm:$0xff] 0.0
  %42 = vst [vmem:[#allocation2 + $0x88] sm:$0xff] 0.0
  %43 = vst [vmem:[#allocation2 + $0x90] sm:$0xff] 0.0
  %44 = vst.msk [vmem:[#allocation2 + $0x98] sm:$0xff] %vm28, 0.0
  %45 = vst [vmem:[#allocation2 + $0xa0] sm:$0xff] 0.0
  %46 = vst [vmem:[#allocation2 + $0xa8] sm:$0xff] 0.0
  %47 = vst [vmem:[#allocation2 + $0xb0] sm:$0xff] 0.0
  %48 = vst [vmem:[#allocation2 + $0xb8] sm:$0xff] 0.0
  %49 = vst.msk [vmem:[#allocation2 + $0xc0] sm:$0xff] %vm28, 0.0
  %50 = vst [vmem:[#allocation2 + $0xc8] sm:$0xff] 0.0
  %51 = vst [vmem:[#allocation2 + $0xd0] sm:$0xff] 0.0
  %52 = vst [vmem:[#allocation2 + $0xd8] sm:$0xff] 0.0
  %53 = vst [vmem:[#allocation2 + $0xe0] sm:$0xff] 0.0
  %54 = vst.msk [vmem:[#allocation2 + $0xe8] sm:$0xff] %vm28, 0.0
  %55 = vst [vmem:[#allocation2 + $0xf0] sm:$0xff] 0.0
  %56 = vst [vmem:[#allocation2 + $0xf8] sm:$0xff] 0.0
  %57 = vst [vmem:[#allocation2 + $0x100] sm:$0xff] 0.0
  %58 = vst [vmem:[#allocation2 + $0x108] sm:$0xff] 0.0
  %59 = vst.msk [vmem:[#allocation2 + $0x110] sm:$0xff] %vm28, 0.0
  %60 = vst [vmem:[#allocation2 + $0x118] sm:$0xff] 0.0
  %61 = vst [vmem:[#allocation2 + $0x120] sm:$0xff] 0.0
  %62 = vst [vmem:[#allocation2 + $0x128] sm:$0xff] 0.0
  %63 = vst [vmem:[#allocation2 + $0x130] sm:$0xff] 0.0
  %64 = vst.msk [vmem:[#allocation2 + $0x138] sm:$0xff] %vm28, 0.0
  %65 = vst [vmem:[#allocation2 + $0x140] sm:$0xff] 0.0
  %66 = vst [vmem:[#allocation2 + $0x148] sm:$0xff] 0.0
  %67 = vst [vmem:[#allocation2 + $0x150] sm:$0xff] 0.0
  %68 = vst [vmem:[#allocation2 + $0x158] sm:$0xff] 0.0
  %69 = vst.msk [vmem:[#allocation2 + $0x160] sm:$0xff] %vm28, 0.0
  %v70 = vld [vmem:[%s0] sm:$0xff]
  %vm71 = vcmp.le.s32.totalorder %v20, 14
  %vm72 = vcmp.le.s32.totalorder %v21, 14
  %vm73 = vcmp.le.s32.totalorder %v22, 14
  %vm74 = vcmp.le.s32.totalorder %v23, 14
  %vm75 = vmand %vm71, %vm73
  %vm76 = vmand %vm72, %vm74
  %v77 = vsel %vm75, 1, 0
  %v78 = vsel %vm76, 1, 0
  %vm79 = vcmp.eq.s32.totalorder %v77, 1
  %vm80 = vcmp.eq.s32.totalorder %v78, 1
  %82 = vst [vmem:[#allocation1] ss:$2 sm:$0xff] %v70
  %v83 = vld.sshfl [vmem:[#allocation1] sm:$0xff pattern:$0x75316420]
  %v84 = vld.sshfl [vmem:[#allocation1 + $0x8] sm:$0xff pattern:$0x75316420]
  %v87 = vsel %vm79, %v83, 0.0
  %v88 = vsel %vm80, %v84, 0.0
  %91 = vrot.lane.b32.xlu0 %v87, 34
  %v92 = vpop.permute.xlu0 %91
  %93 = vrot.lane.b32.xlu0 %v88, 34
  %v94 = vpop.permute.xlu0 %93
  %v95 = vsel %vm28, %v92, %v94
  %vm99 = vcmask 1043728
  %100 = vst.msk [vmem:[#allocation2] sm:$0xf] %vm99, %v92
  %101 = vst [vmem:[#allocation2 + $0x8] sm:$0xf] %v95
  %vm102 = vcmask 273408
  %103 = vst.msk [vmem:[#allocation2 + $0x10] sm:$0xf] %vm102, %v94
  %v104 = vsel %vm71, 1, 0
  %v105 = vsel %vm72, 1, 0
  %vm106 = vcmp.eq.s32.totalorder %v104, 1
  %vm107 = vcmp.eq.s32.totalorder %v105, 1
  %108 = vst [vmem:[#allocation1] ss:$2 sm:$0xff] %v70
  %v109 = vld.sshfl [vmem:[#allocation1] sm:$0xff pattern:$0x75316420]
  %v110 = vld.sshfl [vmem:[#allocation1 + $0x8] sm:$0xff pattern:$0x75316420]
  %v113 = vsel %vm106, %v109, 0.0
  %v114 = vsel %vm107, %v110, 0.0
  %117 = vrot.lane.b32.xlu0 %v113, 33
  %v118 = vpop.permute.xlu0 %117
  %119 = vrot.lane.b32.xlu0 %v114, 33
  %v120 = vpop.permute.xlu0 %119
  %vm121 = vcmask 269312
  %v122 = vsel %vm121, %v118, %v120
  %vm126 = vcmask 1043720
  %127 = vst.msk [vmem:[#allocation2 + $0x28] sm:$0xf] %vm126, %v118
  %128 = vst [vmem:[#allocation2 + $0x30] sm:$0xf] %v122
  %vm129 = vcmask 265216
  %130 = vst.msk [vmem:[#allocation2 + $0x38] sm:$0xf] %vm129, %v120
  %vm131 = vcmp.ge.s32.totalorder %v22, 1
  %vm132 = vcmp.ge.s32.totalorder %v23, 1
  %vm133 = vmand %vm71, %vm131
  %vm134 = vmand %vm72, %vm132
  %v135 = vsel %vm133, 1, 0
  %v136 = vsel %vm134, 1, 0
  %vm137 = vcmp.eq.s32.totalorder %v135, 1
  %vm138 = vcmp.eq.s32.totalorder %v136, 1
  %139 = vst [vmem:[#allocation1] ss:$2 sm:$0xff] %v70
  %v140 = vld.sshfl [vmem:[#allocation1] sm:$0xff pattern:$0x75316420]
  %v141 = vld.sshfl [vmem:[#allocation1 + $0x8] sm:$0xff pattern:$0x75316420]
  %v144 = vsel %vm137, %v140, 0.0
  %v145 = vsel %vm138, %v141, 0.0
  %148 = vrot.lane.b32.xlu0 %v144, 32
  %v149 = vpop.permute.xlu0 %148
  %150 = vrot.lane.b32.xlu0 %v145, 32
  %v151 = vpop.permute.xlu0 %150
  %vm152 = vcmask 261120
  %v153 = vsel %vm152, %v149, %v151
  %vm157 = vcmask 1043712
  %158 = vst.msk [vmem:[#allocation2 + $0x50] sm:$0xf] %vm157, %v149
  %159 = vst [vmem:[#allocation2 + $0x58] sm:$0xf] %v153
  %vm160 = vcmask 257024
  %161 = vst.msk [vmem:[#allocation2 + $0x60] sm:$0xf] %vm160, %v151
  %v162 = vsel %vm73, 1, 0
  %v163 = vsel %vm74, 1, 0
  %vm164 = vcmp.eq.s32.totalorder %v162, 1
  %vm165 = vcmp.eq.s32.totalorder %v163, 1
  %166 = vst [vmem:[#allocation1] ss:$2 sm:$0xff] %v70
  %v167 = vld.sshfl [vmem:[#allocation1] sm:$0xff pattern:$0x75316420]
  %v168 = vld.sshfl [vmem:[#allocation1 + $0x8] sm:$0xff pattern:$0x75316420]
  %v171 = vsel %vm164, %v167, 0.0
  %v172 = vsel %vm165, %v168, 0.0
  %175 = vrot.lane.b32.xlu0 %v171, 18
  %v176 = vpop.permute.xlu0 %175
  %177 = vrot.lane.b32.xlu0 %v172, 18
  %v178 = vpop.permute.xlu0 %177
  %vm179 = vcmask 146432
  %v180 = vsel %vm179, %v176, %v178
  %vm184 = vcmask 1043600
  %185 = vst.msk [vmem:[#allocation2 + $0x78] sm:$0xf] %vm184, %v176
  %186 = vst [vmem:[#allocation2 + $0x80] sm:$0xf] %v180
  %vm187 = vcmask 142336
  %188 = vst.msk [vmem:[#allocation2 + $0x88] sm:$0xf] %vm187, %v178
  %189 = vst [vmem:[#allocation1] ss:$2 sm:$0xff] %v70
  %v190 = vld.sshfl [vmem:[#allocation1] sm:$0xff pattern:$0x75316420]
  %v191 = vld.sshfl [vmem:[#allocation1 + $0x8] sm:$0xff pattern:$0x75316420]
  %192 = vrot.lane.b32.xlu0 %v190, 17
  %v193 = vpop.permute.xlu0 %192
  %194 = vrot.lane.b32.xlu0 %v191, 17
  %v195 = vpop.permute.xlu0 %194
  %vm196 = vcmask 138240
  %v197 = vsel %vm196, %v193, %v195
  %vm201 = vcmask 1043592
  %202 = vst.msk [vmem:[#allocation2 + $0xa0] sm:$0xf] %vm201, %v193
  %203 = vst [vmem:[#allocation2 + $0xa8] sm:$0xf] %v197
  %vm204 = vcmask 134144
  %205 = vst.msk [vmem:[#allocation2 + $0xb0] sm:$0xf] %vm204, %v195
  %v206 = vsel %vm131, 1, 0
  %v207 = vsel %vm132, 1, 0
  %vm208 = vcmp.eq.s32.totalorder %v206, 1
  %vm209 = vcmp.eq.s32.totalorder %v207, 1
  %210 = vst [vmem:[#allocation1] ss:$2 sm:$0xff] %v70
  %v211 = vld.sshfl [vmem:[#allocation1] sm:$0xff pattern:$0x75316420]
  %v212 = vld.sshfl [vmem:[#allocation1 + $0x8] sm:$0xff pattern:$0x75316420]
  %v215 = vsel %vm208, %v211, 0.0
  %v216 = vsel %vm209, %v212, 0.0
  %219 = vrot.lane.b32.xlu0 %v215, 16
  %v220 = vpop.permute.xlu0 %219
  %221 = vrot.lane.b32.xlu0 %v216, 16
  %v222 = vpop.permute.xlu0 %221
  %vm223 = vcmask 130048
  %v224 = vsel %vm223, %v220, %v222
  %vm228 = vcmask 1043584
  %229 = vst.msk [vmem:[#allocation2 + $0xc8] sm:$0xf] %vm228, %v220
  %230 = vst [vmem:[#allocation2 + $0xd0] sm:$0xf] %v224
  %vm231 = vcmask 125952
  %232 = vst.msk [vmem:[#allocation2 + $0xd8] sm:$0xf] %vm231, %v222
  %vm233 = vcmp.ge.s32.totalorder %v20, 1
  %vm234 = vcmp.ge.s32.totalorder %v21, 1
  %vm235 = vmand %vm233, %vm73
  %vm236 = vmand %vm234, %vm74
  %v237 = vsel %vm235, 1, 0
  %v238 = vsel %vm236, 1, 0
  %vm239 = vcmp.eq.s32.totalorder %v237, 1
  %vm240 = vcmp.eq.s32.totalorder %v238, 1
  %241 = vst [vmem:[#allocation1] ss:$2 sm:$0xff] %v70
  %v242 = vld.sshfl [vmem:[#allocation1] sm:$0xff pattern:$0x75316420]
  %v243 = vld.sshfl [vmem:[#allocation1 + $0x8] sm:$0xff pattern:$0x75316420]
  %v246 = vsel %vm239, %v242, 0.0
  %v247 = vsel %vm240, %v243, 0.0
  %250 = vrot.lane.b32.xlu0 %v246, 2
  %v251 = vpop.permute.xlu0 %250
  %252 = vrot.lane.b32.xlu0 %v247, 2
  %v253 = vpop.permute.xlu0 %252
  %vm254 = vcmask 15360
  %v255 = vsel %vm254, %v251, %v253
  %vm259 = vcmask 1043472
  %260 = vst.msk [vmem:[#allocation2 + $0xf0] sm:$0xf] %vm259, %v251
  %261 = vst [vmem:[#allocation2 + $0xf8] sm:$0xf] %v255
  %vm262 = vcmask 11264
  %263 = vst.msk [vmem:[#allocation2 + $0x100] sm:$0xf] %vm262, %v253
  %v264 = vsel %vm233, 1, 0
  %v265 = vsel %vm234, 1, 0
  %vm266 = vcmp.eq.s32.totalorder %v264, 1
  %vm267 = vcmp.eq.s32.totalorder %v265, 1
  %268 = vst [vmem:[#allocation1] ss:$2 sm:$0xff] %v70
  %v269 = vld.sshfl [vmem:[#allocation1] sm:$0xff pattern:$0x75316420]
  %v270 = vld.sshfl [vmem:[#allocation1 + $0x8] sm:$0xff pattern:$0x75316420]
  %v273 = vsel %vm266, %v269, 0.0
  %v274 = vsel %vm267, %v270, 0.0
  %277 = vrot.lane.b32.xlu0 %v273, 1
  %v278 = vpop.permute.xlu0 %277
  %279 = vrot.lane.b32.xlu0 %v274, 1
  %v280 = vpop.permute.xlu0 %279
  %vm281 = vcmask 7168
  %v282 = vsel %vm281, %v278, %v280
  %vm286 = vcmask 1043464
  %287 = vst.msk [vmem:[#allocation2 + $0x118] sm:$0xf] %vm286, %v278
  %288 = vst [vmem:[#allocation2 + $0x120] sm:$0xf] %v282
  %vm289 = vcmask 3072
  %290 = vst.msk [vmem:[#allocation2 + $0x128] sm:$0xf] %vm289, %v280
  %vm291 = vmand %vm233, %vm131
  %vm292 = vmand %vm234, %vm132
  %v293 = vsel %vm291, 1, 0
  %v294 = vsel %vm292, 1, 0
  %vm295 = vcmp.eq.s32.totalorder %v293, 1
  %vm296 = vcmp.eq.s32.totalorder %v294, 1
  %297 = vst [vmem:[#allocation1] ss:$2 sm:$0xff] %v70
  %v298 = vld.sshfl [vmem:[#allocation1] sm:$0xff pattern:$0x75316420]
  %v299 = vld.sshfl [vmem:[#allocation1 + $0x8] sm:$0xff pattern:$0x75316420]
  %v302 = vsel %vm295, %v298, 0.0
  %v303 = vsel %vm296, %v299, 0.0
  %304 = vst [vmem:[#allocation2 + $0x140] sm:$0xf] %v302
  %305 = vst [vmem:[#allocation2 + $0x148] sm:$0xf] %v303
  %s306 = scalar_lea.vmem %s0, 8
  %v307 = vld [vmem:[%s306] sm:$0xff]
  %309 = vst [vmem:[#allocation1] ss:$2 sm:$0xff] %v307
  %v310 = vld.sshfl [vmem:[#allocation1] sm:$0xff pattern:$0x75316420]
  %v311 = vld.sshfl [vmem:[#allocation1 + $0x8] sm:$0xff pattern:$0x75316420]
  %v314 = vsel %vm79, %v310, 0.0
  %v315 = vsel %vm80, %v311, 0.0
  %318 = vrot.lane.b32.xlu0 %v314, 34
  %v319 = vpop.permute.xlu0 %318
  %320 = vrot.lane.b32.xlu0 %v315, 34
  %v321 = vpop.permute.xlu0 %320
  %v322 = vsel %vm28, %v319, %v321
  %326 = vst.msk [vmem:[#allocation2 + $0x10] sm:$0xf] %vm99, %v319
  %327 = vst [vmem:[#allocation2 + $0x18] sm:$0xf] %v322
  %328 = vst.msk [vmem:[#allocation2 + $0x20] sm:$0xf] %vm102, %v321
  %329 = vst [vmem:[#allocation1] ss:$2 sm:$0xff] %v307
  %v330 = vld.sshfl [vmem:[#allocation1] sm:$0xff pattern:$0x75316420]
  %v331 = vld.sshfl [vmem:[#allocation1 + $0x8] sm:$0xff pattern:$0x75316420]
  %v334 = vsel %vm106, %v330, 0.0
  %v335 = vsel %vm107, %v331, 0.0
  %338 = vrot.lane.b32.xlu0 %v334, 33
  %v339 = vpop.permute.xlu0 %338
  %340 = vrot.lane.b32.xlu0 %v335, 33
  %v341 = vpop.permute.xlu0 %340
  %v342 = vsel %vm121, %v339, %v341
  %346 = vst.msk [vmem:[#allocation2 + $0x38] sm:$0xf] %vm126, %v339
  %347 = vst [vmem:[#allocation2 + $0x40] sm:$0xf] %v342
  %348 = vst.msk [vmem:[#allocation2 + $0x48] sm:$0xf] %vm129, %v341
  %349 = vst [vmem:[#allocation1] ss:$2 sm:$0xff] %v307
  %v350 = vld.sshfl [vmem:[#allocation1] sm:$0xff pattern:$0x75316420]
  %v351 = vld.sshfl [vmem:[#allocation1 + $0x8] sm:$0xff pattern:$0x75316420]
  %v354 = vsel %vm137, %v350, 0.0
  %v355 = vsel %vm138, %v351, 0.0
  %358 = vrot.lane.b32.xlu0 %v354, 32
  %v359 = vpop.permute.xlu0 %358
  %360 = vrot.lane.b32.xlu0 %v355, 32
  %v361 = vpop.permute.xlu0 %360
  %v362 = vsel %vm152, %v359, %v361
  %366 = vst.msk [vmem:[#allocation2 + $0x60] sm:$0xf] %vm157, %v359
  %367 = vst [vmem:[#allocation2 + $0x68] sm:$0xf] %v362
  %368 = vst.msk [vmem:[#allocation2 + $0x70] sm:$0xf] %vm160, %v361
  %369 = vst [vmem:[#allocation1] ss:$2 sm:$0xff] %v307
  %v370 = vld.sshfl [vmem:[#allocation1] sm:$0xff pattern:$0x75316420]
  %v371 = vld.sshfl [vmem:[#allocation1 + $0x8] sm:$0xff pattern:$0x75316420]
  %v374 = vsel %vm164, %v370, 0.0
  %v375 = vsel %vm165, %v371, 0.0
  %378 = vrot.lane.b32.xlu0 %v374, 18
  %v379 = vpop.permute.xlu0 %378
  %380 = vrot.lane.b32.xlu0 %v375, 18
  %v381 = vpop.permute.xlu0 %380
  %v382 = vsel %vm179, %v379, %v381
  %386 = vst.msk [vmem:[#allocation2 + $0x88] sm:$0xf] %vm184, %v379
  %387 = vst [vmem:[#allocation2 + $0x90] sm:$0xf] %v382
  %388 = vst.msk [vmem:[#allocation2 + $0x98] sm:$0xf] %vm187, %v381
  %389 = vst [vmem:[#allocation1] ss:$2 sm:$0xff] %v307
  %v390 = vld.sshfl [vmem:[#allocation1] sm:$0xff pattern:$0x75316420]
  %v391 = vld.sshfl [vmem:[#allocation1 + $0x8] sm:$0xff pattern:$0x75316420]
  %392 = vrot.lane.b32.xlu0 %v390, 17
  %v393 = vpop.permute.xlu0 %392
  %394 = vrot.lane.b32.xlu0 %v391, 17
  %v395 = vpop.permute.xlu0 %394
  %v396 = vsel %vm196, %v393, %v395
  %400 = vst.msk [vmem:[#allocation2 + $0xb0] sm:$0xf] %vm201, %v393
  %401 = vst [vmem:[#allocation2 + $0xb8] sm:$0xf] %v396
  %402 = vst.msk [vmem:[#allocation2 + $0xc0] sm:$0xf] %vm204, %v395
  %403 = vst [vmem:[#allocation1] ss:$2 sm:$0xff] %v307
  %v404 = vld.sshfl [vmem:[#allocation1] sm:$0xff pattern:$0x75316420]
  %v405 = vld.sshfl [vmem:[#allocation1 + $0x8] sm:$0xff pattern:$0x75316420]
  %v408 = vsel %vm208, %v404, 0.0
  %v409 = vsel %vm209, %v405, 0.0
  %412 = vrot.lane.b32.xlu0 %v408, 16
  %v413 = vpop.permute.xlu0 %412
  %414 = vrot.lane.b32.xlu0 %v409, 16
  %v415 = vpop.permute.xlu0 %414
  %v416 = vsel %vm223, %v413, %v415
  %420 = vst.msk [vmem:[#allocation2 + $0xd8] sm:$0xf] %vm228, %v413
  %421 = vst [vmem:[#allocation2 + $0xe0] sm:$0xf] %v416
  %422 = vst.msk [vmem:[#allocation2 + $0xe8] sm:$0xf] %vm231, %v415
  %423 = vst [vmem:[#allocation1] ss:$2 sm:$0xff] %v307
  %v424 = vld.sshfl [vmem:[#allocation1] sm:$0xff pattern:$0x75316420]
  %v425 = vld.sshfl [vmem:[#allocation1 + $0x8] sm:$0xff pattern:$0x75316420]
  %v428 = vsel %vm239, %v424, 0.0
  %v429 = vsel %vm240, %v425, 0.0
  %432 = vrot.lane.b32.xlu0 %v428, 2
  %v433 = vpop.permute.xlu0 %432
  %434 = vrot.lane.b32.xlu0 %v429, 2
  %v435 = vpop.permute.xlu0 %434
  %v436 = vsel %vm254, %v433, %v435
  %440 = vst.msk [vmem:[#allocation2 + $0x100] sm:$0xf] %vm259, %v433
  %441 = vst [vmem:[#allocation2 + $0x108] sm:$0xf] %v436
  %442 = vst.msk [vmem:[#allocation2 + $0x110] sm:$0xf] %vm262, %v435
  %443 = vst [vmem:[#allocation1] ss:$2 sm:$0xff] %v307
  %v444 = vld.sshfl [vmem:[#allocation1] sm:$0xff pattern:$0x75316420]
  %v445 = vld.sshfl [vmem:[#allocation1 + $0x8] sm:$0xff pattern:$0x75316420]
  %v448 = vsel %vm266, %v444, 0.0
  %v449 = vsel %vm267, %v445, 0.0
  %452 = vrot.lane.b32.xlu0 %v448, 1
  %v453 = vpop.permute.xlu0 %452
  %454 = vrot.lane.b32.xlu0 %v449, 1
  %v455 = vpop.permute.xlu0 %454
  %v456 = vsel %vm281, %v453, %v455
  %460 = vst.msk [vmem:[#allocation2 + $0x128] sm:$0xf] %vm286, %v453
  %461 = vst [vmem:[#allocation2 + $0x130] sm:$0xf] %v456
  %462 = vst.msk [vmem:[#allocation2 + $0x138] sm:$0xf] %vm289, %v455
  %463 = vst [vmem:[#allocation1] ss:$2 sm:$0xff] %v307
  %v464 = vld.sshfl [vmem:[#allocation1] sm:$0xff pattern:$0x75316420]
  %v465 = vld.sshfl [vmem:[#allocation1 + $0x8] sm:$0xff pattern:$0x75316420]
  %v468 = vsel %vm295, %v464, 0.0
  %v469 = vsel %vm296, %v465, 0.0
  %470 = vst [vmem:[#allocation2 + $0x150] sm:$0xf] %v468
  %471 = vst [vmem:[#allocation2 + $0x158] sm:$0xf] %v469
  %v472 = vld [vmem:[#allocation2] sm:$0xff]
  %v473 = vld [vmem:[#allocation2 + $0x8] sm:$0xff]
  %v474 = vld [vmem:[#allocation2 + $0x10] sm:$0xff]
  %v475 = vld [vmem:[#allocation2 + $0x18] sm:$0xff]
  %v476 = vld [vmem:[#allocation2 + $0x20] sm:$0xff]
  %v477 = vld [vmem:[#allocation2 + $0x28] sm:$0xff]
  %v478 = vld [vmem:[#allocation2 + $0x30] sm:$0xff]
  %v479 = vld [vmem:[#allocation2 + $0x38] sm:$0xff]
  %v480 = vld [vmem:[#allocation2 + $0x40] sm:$0xff]
  %v481 = vld [vmem:[#allocation2 + $0x48] sm:$0xff]
  %v482 = vld [vmem:[#allocation2 + $0x50] sm:$0xff]
  %v483 = vld [vmem:[#allocation2 + $0x58] sm:$0xff]
  %v484 = vld [vmem:[#allocation2 + $0x60] sm:$0xff]
  %v485 = vld [vmem:[#allocation2 + $0x68] sm:$0xff]
  %v486 = vld [vmem:[#allocation2 + $0x70] sm:$0xff]
  %v487 = vld [vmem:[#allocation2 + $0x78] sm:$0xff]
  %v488 = vld [vmem:[#allocation2 + $0x80] sm:$0xff]
  %v489 = vld [vmem:[#allocation2 + $0x88] sm:$0xff]
  %v490 = vld [vmem:[#allocation2 + $0x90] sm:$0xff]
  %v491 = vld [vmem:[#allocation2 + $0x98] sm:$0xff]
  %v492 = vld [vmem:[#allocation2 + $0xa0] sm:$0xff]
  %v493 = vld [vmem:[#allocation2 + $0xa8] sm:$0xff]
  %v494 = vld [vmem:[#allocation2 + $0xb0] sm:$0xff]
  %v495 = vld [vmem:[#allocation2 + $0xb8] sm:$0xff]
  %v496 = vld [vmem:[#allocation2 + $0xc0] sm:$0xff]
  %v497 = vld [vmem:[#allocation2 + $0xc8] sm:$0xff]
  %v498 = vld [vmem:[#allocation2 + $0xd0] sm:$0xff]
  %v499 = vld [vmem:[#allocation2 + $0xd8] sm:$0xff]
  %v500 = vld [vmem:[#allocation2 + $0xe0] sm:$0xff]
  %v501 = vld [vmem:[#allocation2 + $0xe8] sm:$0xff]
  %v502 = vld [vmem:[#allocation2 + $0xf0] sm:$0xff]
  %v503 = vld [vmem:[#allocation2 + $0xf8] sm:$0xff]
  %v504 = vld [vmem:[#allocation2 + $0x100] sm:$0xff]
  %v505 = vld [vmem:[#allocation2 + $0x108] sm:$0xff]
  %v506 = vld [vmem:[#allocation2 + $0x110] sm:$0xff]
  %v507 = vld [vmem:[#allocation2 + $0x118] sm:$0xff]
  %v508 = vld [vmem:[#allocation2 + $0x120] sm:$0xff]
  %v509 = vld [vmem:[#allocation2 + $0x128] sm:$0xff]
  %v510 = vld [vmem:[#allocation2 + $0x130] sm:$0xff]
  %v511 = vld [vmem:[#allocation2 + $0x138] sm:$0xff]
  %v512 = vld [vmem:[#allocation2 + $0x140] sm:$0xff]
  %v513 = vld [vmem:[#allocation2 + $0x148] sm:$0xff]
  %v514 = vld [vmem:[#allocation2 + $0x150] sm:$0xff]
  %v515 = vld [vmem:[#allocation2 + $0x158] sm:$0xff]
  %v516 = vld [vmem:[#allocation2 + $0x160] sm:$0xff]
  %v517 = vld [vmem:[%s1] sm:$0xff]
  %563 = vrot.lane.b32.xlu0 %v472, 111
  %v564 = vpop.permute.xlu0 %563
  %565 = vrot.lane.b32.xlu0 %v473, 111
  %v566 = vpop.permute.xlu0 %565
  %567 = vrot.lane.b32.xlu0 %v474, 111
  %v568 = vpop.permute.xlu0 %567
  %569 = vrot.lane.b32.xlu0 %v475, 111
  %v570 = vpop.permute.xlu0 %569
  %571 = vrot.lane.b32.xlu0 %v476, 111
  %v572 = vpop.permute.xlu0 %571
  %573 = vrot.lane.b32.xlu0 %v477, 111
  %v574 = vpop.permute.xlu0 %573
  %575 = vrot.lane.b32.xlu0 %v478, 111
  %v576 = vpop.permute.xlu0 %575
  %577 = vrot.lane.b32.xlu0 %v479, 111
  %v578 = vpop.permute.xlu0 %577
  %579 = vrot.lane.b32.xlu0 %v480, 111
  %v580 = vpop.permute.xlu0 %579
  %581 = vrot.lane.b32.xlu0 %v481, 111
  %v582 = vpop.permute.xlu0 %581
  %583 = vrot.lane.b32.xlu0 %v482, 111
  %v584 = vpop.permute.xlu0 %583
  %585 = vrot.lane.b32.xlu0 %v483, 111
  %v586 = vpop.permute.xlu0 %585
  %587 = vrot.lane.b32.xlu0 %v484, 111
  %v588 = vpop.permute.xlu0 %587
  %589 = vrot.lane.b32.xlu0 %v485, 111
  %v590 = vpop.permute.xlu0 %589
  %591 = vrot.lane.b32.xlu0 %v486, 111
  %v592 = vpop.permute.xlu0 %591
  %593 = vrot.lane.b32.xlu0 %v487, 111
  %v594 = vpop.permute.xlu0 %593
  %595 = vrot.lane.b32.xlu0 %v488, 111
  %v596 = vpop.permute.xlu0 %595
  %597 = vrot.lane.b32.xlu0 %v489, 111
  %v598 = vpop.permute.xlu0 %597
  %599 = vrot.lane.b32.xlu0 %v490, 111
  %v600 = vpop.permute.xlu0 %599
  %601 = vrot.lane.b32.xlu0 %v491, 111
  %v602 = vpop.permute.xlu0 %601
  %603 = vrot.lane.b32.xlu0 %v492, 111
  %v604 = vpop.permute.xlu0 %603
  %605 = vrot.lane.b32.xlu0 %v493, 111
  %v606 = vpop.permute.xlu0 %605
  %607 = vrot.lane.b32.xlu0 %v494, 111
  %v608 = vpop.permute.xlu0 %607
  %609 = vrot.lane.b32.xlu0 %v495, 111
  %v610 = vpop.permute.xlu0 %609
  %611 = vrot.lane.b32.xlu0 %v496, 111
  %v612 = vpop.permute.xlu0 %611
  %613 = vrot.lane.b32.xlu0 %v497, 111
  %v614 = vpop.permute.xlu0 %613
  %615 = vrot.lane.b32.xlu0 %v498, 111
  %v616 = vpop.permute.xlu0 %615
  %617 = vrot.lane.b32.xlu0 %v499, 111
  %v618 = vpop.permute.xlu0 %617
  %619 = vrot.lane.b32.xlu0 %v500, 111
  %v620 = vpop.permute.xlu0 %619
  %621 = vrot.lane.b32.xlu0 %v501, 111
  %v622 = vpop.permute.xlu0 %621
  %623 = vrot.lane.b32.xlu0 %v502, 111
  %v624 = vpop.permute.xlu0 %623
  %625 = vrot.lane.b32.xlu0 %v503, 111
  %v626 = vpop.permute.xlu0 %625
  %627 = vrot.lane.b32.xlu0 %v504, 111
  %v628 = vpop.permute.xlu0 %627
  %629 = vrot.lane.b32.xlu0 %v505, 111
  %v630 = vpop.permute.xlu0 %629
  %631 = vrot.lane.b32.xlu0 %v506, 111
  %v632 = vpop.permute.xlu0 %631
  %633 = vrot.lane.b32.xlu0 %v507, 111
  %v634 = vpop.permute.xlu0 %633
  %635 = vrot.lane.b32.xlu0 %v508, 111
  %v636 = vpop.permute.xlu0 %635
  %637 = vrot.lane.b32.xlu0 %v509, 111
  %v638 = vpop.permute.xlu0 %637
  %639 = vrot.lane.b32.xlu0 %v510, 111
  %v640 = vpop.permute.xlu0 %639
  %641 = vrot.lane.b32.xlu0 %v511, 111
  %v642 = vpop.permute.xlu0 %641
  %643 = vrot.lane.b32.xlu0 %v512, 111
  %v644 = vpop.permute.xlu0 %643
  %645 = vrot.lane.b32.xlu0 %v513, 111
  %v646 = vpop.permute.xlu0 %645
  %647 = vrot.lane.b32.xlu0 %v514, 111
  %v648 = vpop.permute.xlu0 %647
  %649 = vrot.lane.b32.xlu0 %v515, 111
  %v650 = vpop.permute.xlu0 %649
  %651 = vrot.lane.b32.xlu0 %v516, 111
  %v652 = vpop.permute.xlu0 %651
  %vm653 = vcmask 908288
  %v654 = vsel %vm653, %v564, %v566
  %v655 = vsel %vm653, %v566, %v568
  %v656 = vsel %vm653, %v568, %v570
  %v657 = vsel %vm653, %v570, %v572
  %v658 = vsel %vm653, %v574, %v576
  %v659 = vsel %vm653, %v576, %v578
  %v660 = vsel %vm653, %v578, %v580
  %v661 = vsel %vm653, %v580, %v582
  %v662 = vsel %vm653, %v584, %v586
  %v663 = vsel %vm653, %v586, %v588
  %v664 = vsel %vm653, %v588, %v590
  %v665 = vsel %vm653, %v590, %v592
  %v666 = vsel %vm653, %v594, %v596
  %v667 = vsel %vm653, %v596, %v598
  %v668 = vsel %vm653, %v598, %v600
  %v669 = vsel %vm653, %v600, %v602
  %v670 = vsel %vm653, %v604, %v606
  %v671 = vsel %vm653, %v606, %v608
  %v672 = vsel %vm653, %v608, %v610
  %v673 = vsel %vm653, %v610, %v612
  %v674 = vsel %vm653, %v614, %v616
  %v675 = vsel %vm653, %v616, %v618
  %v676 = vsel %vm653, %v618, %v620
  %v677 = vsel %vm653, %v620, %v622
  %v678 = vsel %vm653, %v624, %v626
  %v679 = vsel %vm653, %v626, %v628
  %v680 = vsel %vm653, %v628, %v630
  %v681 = vsel %vm653, %v630, %v632
  %v682 = vsel %vm653, %v634, %v636
  %v683 = vsel %vm653, %v636, %v638
  %v684 = vsel %vm653, %v638, %v640
  %v685 = vsel %vm653, %v640, %v642
  %v686 = vsel %vm653, %v644, %v646
  %v687 = vsel %vm653, %v646, %v648
  %v688 = vsel %vm653, %v648, %v650
  %v689 = vsel %vm653, %v650, %v652
  %vm726 = vcmask 588800
  %v728 = vsel %vm726, %v517, 0
  %730 = vmatpush.msra.mxu0 0.0
  %731 = vmatpush.msra.mxu0 0.0
  %732 = vmatpush.msra.mxu0 0.0
  %733 = vmatpush.msra.mxu0 0.0
  %734 = vmatpush.msra.mxu0 0.0
  %735 = vmatpush.msra.mxu0 0.0
  %736 = vmatpush.msra.mxu0 0.0
  %737 = vmatpush.msra.mxu0 %v686
  %738 = vmatpush.msra.mxu0 %v682
  %739 = vmatpush.msra.mxu0 %v678
  %740 = vmatpush.msra.mxu0 %v674
  %741 = vmatpush.msra.mxu0 %v670
  %742 = vmatpush.msra.mxu0 %v666
  %743 = vmatpush.msra.mxu0 %v662
  %744 = vmatpush.msra.mxu0 %v658
  %745 = vmatpush.msra.mxu0 %v654
  %746 = vmatmul.f32.gmra.mxu0 %v728
  %v747 = vpop.f32.mrf.mxu0
  %v748 = vadd.f32 0.0, %v747
  %749 = vdwg.mxu0
  %750 = vmatpush.msra.mxu0 0.0
  %751 = vmatpush.msra.mxu0 0.0
  %752 = vmatpush.msra.mxu0 0.0
  %753 = vmatpush.msra.mxu0 0.0
  %754 = vmatpush.msra.mxu0 0.0
  %755 = vmatpush.msra.mxu0 0.0
  %756 = vmatpush.msra.mxu0 0.0
  %757 = vmatpush.msra.mxu0 %v687
  %758 = vmatpush.msra.mxu0 %v683
  %759 = vmatpush.msra.mxu0 %v679
  %760 = vmatpush.msra.mxu0 %v675
  %761 = vmatpush.msra.mxu0 %v671
  %762 = vmatpush.msra.mxu0 %v667
  %763 = vmatpush.msra.mxu0 %v663
  %764 = vmatpush.msra.mxu0 %v659
  %765 = vmatpush.msra.mxu0 %v655
  %766 = vmatmul.f32.gmra.mxu0 %v728
  %v767 = vpop.f32.mrf.mxu0
  %v768 = vadd.f32 0.0, %v767
  %769 = vdwg.mxu0
  %770 = vmatpush.msra.mxu0 0.0
  %771 = vmatpush.msra.mxu0 0.0
  %772 = vmatpush.msra.mxu0 0.0
  %773 = vmatpush.msra.mxu0 0.0
  %774 = vmatpush.msra.mxu0 0.0
  %775 = vmatpush.msra.mxu0 0.0
  %776 = vmatpush.msra.mxu0 0.0
  %777 = vmatpush.msra.mxu0 %v688
  %778 = vmatpush.msra.mxu0 %v684
  %779 = vmatpush.msra.mxu0 %v680
  %780 = vmatpush.msra.mxu0 %v676
  %781 = vmatpush.msra.mxu0 %v672
  %782 = vmatpush.msra.mxu0 %v668
  %783 = vmatpush.msra.mxu0 %v664
  %784 = vmatpush.msra.mxu0 %v660
  %785 = vmatpush.msra.mxu0 %v656
  %786 = vmatmul.f32.gmra.mxu0 %v728
  %v787 = vpop.f32.mrf.mxu0
  %v788 = vadd.f32 0.0, %v787
  %789 = vdwg.mxu0
  %790 = vmatpush.msra.mxu0 0.0
  %791 = vmatpush.msra.mxu0 0.0
  %792 = vmatpush.msra.mxu0 0.0
  %793 = vmatpush.msra.mxu0 0.0
  %794 = vmatpush.msra.mxu0 0.0
  %795 = vmatpush.msra.mxu0 0.0
  %796 = vmatpush.msra.mxu0 0.0
  %797 = vmatpush.msra.mxu0 %v689
  %798 = vmatpush.msra.mxu0 %v685
  %799 = vmatpush.msra.mxu0 %v681
  %800 = vmatpush.msra.mxu0 %v677
  %801 = vmatpush.msra.mxu0 %v673
  %802 = vmatpush.msra.mxu0 %v669
  %803 = vmatpush.msra.mxu0 %v665
  %804 = vmatpush.msra.mxu0 %v661
  %805 = vmatpush.msra.mxu0 %v657
  %806 = vmatmul.f32.gmra.mxu0 %v728
  %v807 = vpop.f32.mrf.mxu0
  %v808 = vadd.f32 0.0, %v807
  %809 = vdwg.mxu0
  %v810 = vadd.f32 %v748, %v768
  %v811 = vadd.f32 %v810, %v788
  %v812 = vadd.f32 %v811, %v808
  %813 = vadd.xlane.f32.xlu0 %v812
  %v814 = vpop.xlane.xlu0 %813
  %v815 = vmul.f32 %v748, %v748
  %v816 = vmul.f32 %v768, %v768
  %v817 = vmul.f32 %v788, %v788
  %v818 = vmul.f32 %v808, %v808
  %v819 = vadd.f32 %v815, %v816
  %v820 = vadd.f32 %v819, %v817
  %v821 = vadd.f32 %v820, %v818
  %822 = vadd.xlane.f32.xlu0 %v821
  %v823 = vpop.xlane.xlu0 %822
  %v824 = vmul.f32 %v814, 0.001953125
  %v825 = vmul.f32 %v823, 0.001953125
  %v826 = vmul.f32 %v824, %v824
  %v827 = vsub.f32 %v825, %v826
  %v828 = vadd.f32 %v827, 1e-05
  %v829 = vrsqrt.pop %v828
  %v830 = vmul.f32 %v829, %v828
  %v831 = vmul.f32 %v830, %v829
  %v832 = vmul.f32 0.5, %v831
  %v833 = vsub.f32 1.5, %v832
  %v834 = vmul.f32 %v829, %v833
  %vm835 = vweird.f32 %v828
  %vm836 = vweird.f32 %v829
  %vm837 = vmor %vm835, %vm836
  %v838 = vsel %vm837, %v829, %v834
  %v839 = vld [vmem:[%s2] sm:$0xff]
  %v840 = vmul.f32 %v838, %v839
  %v841 = vld [vmem:[%s3] sm:$0xff]
  %v842 = vmul.f32 %v824, %v840
  %v843 = vsub.f32 %v841, %v842
  %845 = vset.pattern.permute.xlu0 0
  %846 = vperm.xlu0 %845, %v840
  %v847 = vpop.permute.xlu0 %846
  %v849 = vmul.f32 %v748, %v847
  %v850 = vmul.f32 %v768, %v847
  %v851 = vmul.f32 %v788, %v847
  %v852 = vmul.f32 %v808, %v847
  %854 = vset.pattern.permute.xlu0 0
  %855 = vperm.xlu0 %854, %v843
  %v856 = vpop.permute.xlu0 %855
  %v858 = vadd.f32 %v849, %v856
  %v859 = vadd.f32 %v850, %v856
  %v860 = vadd.f32 %v851, %v856
  %v861 = vadd.f32 %v852, %v856
  %862 = vst [vmem:[%s4] sm:$0xff] %v858
  %863 = vst [vmem:[%s4 + $0x8] sm:$0xff] %v859
  %s864 = scalar_lea.vmem %s4, 16
  %865 = vst [vmem:[%s864] sm:$0xff] %v860
  %866 = vst [vmem:[%s864 + $0x8] sm:$0xff] %v861
  // Predicated region
  $region18: #{conv_block_forward.1} parent=0 // pred_check
    _
  $region19: #{conv_block_forward.1} parent=0 // pred_check_branch
    %868 = sbr.rel (0) target = $region21
  $region20: #{conv_block_forward.1} parent=0 // pred_region
    _
  $region21: #{conv_block_forward.1} parent=0 // pred_fallthru
    _
  // Predicated region
  $region22: #{conv_block_forward.1} parent=0 // pred_check
    _
  $region23: #{conv_block_forward.1} parent=0 // pred_check_branch
    %870 = sbr.rel (0) target = $region25
  $region24: #{conv_block_forward.1} parent=0 // pred_region
    _
  $region25: #{conv_block_forward.1} parent=0 // pred_fallthru
    _

</llo_original>
